<compile_context>
chip_gen: v7x
topology: tpu7x:2x2x1
jax: 0.10.0
libtpu: 0.0.40
codegen_flags: <defaults>
</compile_context>

<pallas_src>
import functools

import jax
import jax.numpy as jnp
import numpy as np
from jax.experimental import pallas as pl
from jax.experimental.pallas import tpu as pltpu


# ---------------------------------------------------------------------------
# Kernel 1: per-tile channel [sum, sumsq] partials (no conv writeback)
# ---------------------------------------------------------------------------
def _conv_stats_kernel(x_ref, w_ref, part_ref):
    # x_ref   : [TILE_M, KKC]  bf16
    # w_ref   : [KKC, CP]      bf16
    # part_ref: [8, CP]        f32   (row 0 = sum, row 1 = sumsq, rest 0)
    acc = jnp.dot(x_ref[...], w_ref[...], preferred_element_type=jnp.float32)

    # Sublane (axis-0) reductions via a ones-matmul -> MXU, not VPU/XLU.
    ones = jnp.ones((8, acc.shape[0]), jnp.float32)
    s8 = jnp.dot(ones, acc, preferred_element_type=jnp.float32)        # [8, CP]
    ss8 = jnp.dot(ones, acc * acc, preferred_element_type=jnp.float32)  # [8, CP]

    row = jax.lax.broadcasted_iota(jnp.int32, part_ref.shape, 0)
    part_ref[...] = jnp.where(row == 0, s8, jnp.where(row == 1, ss8, 0.0))


# ---------------------------------------------------------------------------
# Kernel 2: recompute conv tile + fused BN affine + per-channel PReLU
# ---------------------------------------------------------------------------
def _conv_bn_prelu_kernel(x_ref, w_ref, p_ref, o_ref):
    # x_ref: [TILE_M, KKC] bf16, w_ref: [KKC, CP] bf16
    # p_ref: [8, CP] f32 (row 0 = scale, row 1 = shift, row 2 = alpha)
    # o_ref: [TILE_M, Cout] f32  (narrow output, Cout == full array dim)
    acc = jnp.dot(x_ref[...], w_ref[...], preferred_element_type=jnp.float32)
    scale = p_ref[0:1, :]
    shift = p_ref[1:2, :]
    alpha = p_ref[2:3, :]
    y = acc * scale + shift
    y = jnp.where(y >= 0.0, y, alpha * y)
    o_ref[...] = y[:, : o_ref.shape[1]].astype(o_ref.dtype)


def _pick_tile_m(M: int) -> int:
    # Largest power-of-two tile <= 1024 that still leaves >= 4 grid steps
    # (so each of v7x's two TensorCores gets >= 2 tiles); never below 128.
    tm = 1024
    while tm > 128 and pl.cdiv(M, tm) < 4:
        tm //= 2
    return tm


@functools.partial(jax.jit, static_argnames=("stride", "padding", "eps"))
def conv_block_forward(x_nchw, weight_oihw, gamma, beta, alpha,
                       *, stride: int, padding: int, eps: float = 1e-5):
    """ConvBlock forward. x_nchw: [N, Cin, H, W] -> [N, Cout, Ho, Wo]."""
    N, Cin, H, W = x_nchw.shape
    Cout, Cin_w, K, K2 = weight_oihw.shape
    assert Cin_w == Cin and K == K2
    Ho = (H + 2 * padding - K) // stride + 1
    Wo = (W + 2 * padding - K) // stride + 1
    M = N * Ho * Wo
    KKC = K * K * Cin

    TILE_M = _pick_tile_m(M)
    num_tiles = pl.cdiv(M, TILE_M)
    M_pad = num_tiles * TILE_M
    CP = ((Cout + 127) // 128) * 128          # lane-dense channel dim (params/weights)

    # --- wrapper im2col: NCHW -> NHWC, cast to bf16 FIRST, pad, pack taps ---
    x = jnp.transpose(x_nchw, (0, 2, 3, 1)).astype(jnp.bfloat16)       # [N,H,W,Cin]
    xp = jnp.pad(x, ((0, 0), (padding, padding), (padding, padding), (0, 0)))
    taps = []
    for kh in range(K):
        for kw in range(K):
            taps.append(xp[:,
                           kh:kh + stride * (Ho - 1) + 1:stride,
                           kw:kw + stride * (Wo - 1) + 1:stride, :])    # [N,Ho,Wo,Cin]
    x_packed = jnp.concatenate(taps, axis=-1).reshape(M, KKC)          # (kh,kw,cin)
    x_packed = jnp.pad(x_packed, ((0, M_pad - M), (0, 0)))             # bf16 slab

    # weight [Cout,Cin,K,K] -> [K,K,Cin,Cout] -> [KKC, CP]  (same tap order)
    w2d = jnp.transpose(weight_oihw, (2, 3, 1, 0)).reshape(KKC, Cout)
    w2d = jnp.pad(w2d, ((0, 0), (0, CP - Cout))).astype(jnp.bfloat16)

    gamma_p = jnp.pad(gamma.astype(jnp.float32), (0, CP - Cout))
    beta_p = jnp.pad(beta.astype(jnp.float32), (0, CP - Cout))
    alpha_p = jnp.pad(alpha.astype(jnp.float32), (0, CP - Cout))

    # --- VMEM budget: double-buffered tiles + headroom, capped for v7x ---
    tile_bytes = (TILE_M * KKC * 2          # x tile (bf16)
                  + KKC * CP * 2            # weight slab (bf16)
                  + 8 * CP * 4              # partials / params (f32)
                  + TILE_M * Cout * 4)      # narrow output tile (f32)
    vmem_limit = int(min(48 * 1024 * 1024,
                         max(16 * 1024 * 1024, 4 * tile_bytes + (1 << 20))))
    cparams = pltpu.CompilerParams(
        dimension_semantics=("parallel",),
        vmem_limit_bytes=vmem_limit,
    )

    # --- pass 1: per-tile channel [sum, sumsq] partials only (no conv slab) ---
    partials = pl.pallas_call(
        _conv_stats_kernel,
        out_shape=jax.ShapeDtypeStruct((num_tiles * 8, CP), jnp.float32),
        grid=(num_tiles,),
        in_specs=[pl.BlockSpec((TILE_M, KKC), lambda i: (i, 0)),
                  pl.BlockSpec((KKC, CP), lambda i: (0, 0))],
        out_specs=pl.BlockSpec((8, CP), lambda i: (i, 0)),
        compiler_params=cparams,
    )(x_packed, w2d)

    # --- tiny cross-tile reduction + fused BN scale/shift (O(Cout) work) ---
    # TODO(synk): single-pass E[x^2]-E[x]^2 can cancel catastrophically for
    # very large M with |mean| >> std; fine at these sizes (f32, clamped).
    parts = partials.reshape(num_tiles, 8, CP)
    ch_sum = jnp.sum(parts[:, 0, :], axis=0)
    ch_sumsq = jnp.sum(parts[:, 1, :], axis=0)
    mean = ch_sum / M                                   # padded rows contribute 0
    var = jnp.maximum(ch_sumsq / M - mean * mean, 0.0)  # biased (training) var
    scale = gamma_p * jax.lax.rsqrt(var + eps)          # padded lanes: gamma=0 -> 0
    shift = beta_p - mean * scale
    params = jnp.zeros((8, CP), jnp.float32)
    params = params.at[0].set(scale).at[1].set(shift).at[2].set(alpha_p)

    # --- pass 2: recompute conv tile, BN affine + PReLU, narrow f32 output ---
    out2d = pl.pallas_call(
        _conv_bn_prelu_kernel,
        out_shape=jax.ShapeDtypeStruct((M_pad, Cout), jnp.float32),
        grid=(num_tiles,),
        in_specs=[pl.BlockSpec((TILE_M, KKC), lambda i: (i, 0)),
                  pl.BlockSpec((KKC, CP), lambda i: (0, 0)),
                  pl.BlockSpec((8, CP), lambda i: (0, 0))],
        out_specs=pl.BlockSpec((TILE_M, Cout), lambda i: (i, 0)),
        compiler_params=cparams,
    )(x_packed, w2d, params)

    out = out2d[:M, :].reshape(N, Ho, Wo, Cout)
    return jnp.transpose(out, (0, 3, 1, 2))             # back to NCHW


def _reference(x_nchw, weight_oihw, gamma, beta, alpha, *, stride, padding, eps=1e-5):
    """Pure-JAX reference mirroring PyTorch semantics (training-mode BN)."""
    y = jax.lax.conv_general_dilated(
        x_nchw.astype(jnp.float32), weight_oihw.astype(jnp.float32),
        window_strides=(stride, stride),
        padding=[(padding, padding), (padding, padding)],
        dimension_numbers=("NCHW", "OIHW", "NCHW"))
    mean = jnp.mean(y, axis=(0, 2, 3), keepdims=True)
    var = jnp.mean(jnp.square(y - mean), axis=(0, 2, 3), keepdims=True)
    y = (y - mean) * jax.lax.rsqrt(var + eps)
    y = y * gamma.reshape(1, -1, 1, 1) + beta.reshape(1, -1, 1, 1)
    a = alpha.reshape(1, -1, 1, 1)
    return jnp.where(y >= 0.0, y, a * y)


if __name__ == "__main__":
    # ConvBlock(4, 8, kernelSize=3, stride=1, padding=1) at small shapes.
    N, Cin, H, W = 2, 4, 16, 16
    Cout, K, stride, padding = 8, 3, 1, 1

    key = jax.random.PRNGKey(0)
    kx, kw, kg, kb = jax.random.split(key, 4)
    x = jax.random.normal(kx, (N, Cin, H, W), dtype=jnp.float32)
    weight = jax.random.normal(kw, (Cout, Cin, K, K), dtype=jnp.float32) * 0.1
    gamma = 1.0 + 0.1 * jax.random.normal(kg, (Cout,), dtype=jnp.float32)  # BN weight
    beta = 0.1 * jax.random.normal(kb, (Cout,), dtype=jnp.float32)         # BN bias
    alpha = jnp.full((Cout,), 0.25, dtype=jnp.float32)                     # PReLU init

    out = conv_block_forward(x, weight, gamma, beta, alpha,
                             stride=stride, padding=padding)
    out = jax.block_until_ready(out)
    assert out.shape == (N, Cout, H, W), out.shape

    ref = jax.block_until_ready(
        _reference(x, weight, gamma, beta, alpha, stride=stride, padding=padding))
    # bf16 MXU operands (f32 accumulation everywhere) -> relaxed tolerance.
    if not np.allclose(np.asarray(out), np.asarray(ref), rtol=2e-2, atol=2e-2):
        err = np.max(np.abs(np.asarray(out) - np.asarray(ref)))
        raise AssertionError(f"Pallas ConvBlock output mismatch, max abs err {err}")

    print("KERNEL_OK")
</pallas_src>

<mosaic_0001>
module attributes {stable_mosaic.version = 11 : i64} {
  func.func @_conv_stats_kernel(%arg0: i32, %arg1: memref<128x36xbf16, #tpu.memory_space<vmem>>, %arg2: memref<36x128xbf16, #tpu.memory_space<vmem>>, %arg3: memref<8x128xf32, #tpu.memory_space<vmem>>) attributes {dimension_semantics = [#tpu.dimension_semantics<parallel>], iteration_bounds = array<i64: 4>, scalar_prefetch = 0 : i64, scratch_operands = 0 : i64, tpu.core_type = #tpu.core_type<tc>, window_params = [{transform_indices = @transform_0, window_bounds = array<i64: 128, 36>}, {pipeline_mode = #tpu.pipeline_mode<synchronous>, transform_indices = @transform_1, window_bounds = array<i64: 36, 128>}, {transform_indices = @transform_2, window_bounds = array<i64: 8, 128>}]} {
    %c0 = arith.constant 0 : index
    %c0_0 = arith.constant 0 : index
    %0 = vector.load %arg1[%c0, %c0_0] : memref<128x36xbf16, #tpu.memory_space<vmem>>, vector<128x36xbf16>
    %c0_1 = arith.constant 0 : index
    %c0_2 = arith.constant 0 : index
    %1 = vector.load %arg2[%c0_1, %c0_2] : memref<36x128xbf16, #tpu.memory_space<vmem>>, vector<36x128xbf16>
    %cst = arith.constant dense<0.000000e+00> : vector<128x128xf32>
    %2 = tpu.matmul %0, %1, %cst {dimension_numbers = #tpu.dot_dimension_numbers<[1], [0], [0], [1], [0, 0, 1, 1], [], []>} : vector<128x36xbf16>, vector<36x128xbf16>, vector<128x128xf32> -> vector<128x128xf32>
    %cst_3 = arith.constant 1.000000e+00 : f32
    %3 = vector.broadcast %cst_3 : f32 to vector<8x128xf32>
    %cst_4 = arith.constant dense<0.000000e+00> : vector<8x128xf32>
    %4 = tpu.matmul %3, %2, %cst_4 {dimension_numbers = #tpu.dot_dimension_numbers<[1], [0], [0], [1], [0, 0, 1, 1], [], []>} : vector<8x128xf32>, vector<128x128xf32>, vector<8x128xf32> -> vector<8x128xf32>
    %5 = arith.mulf %2, %2 : vector<128x128xf32>
    %cst_5 = arith.constant dense<0.000000e+00> : vector<8x128xf32>
    %6 = tpu.matmul %3, %5, %cst_5 {dimension_numbers = #tpu.dot_dimension_numbers<[1], [0], [0], [1], [0, 0, 1, 1], [], []>} : vector<8x128xf32>, vector<128x128xf32>, vector<8x128xf32> -> vector<8x128xf32>
    %7 = tpu.iota {dimensions = array<i32: 0>} : vector<8x128xi32>
    %c0_i32 = arith.constant 0 : i32
    %8 = vector.broadcast %c0_i32 : i32 to vector<8x128xi32>
    %9 = arith.cmpi eq, %7, %8 : vector<8x128xi32>
    %c1_i32 = arith.constant 1 : i32
    %10 = vector.broadcast %c1_i32 : i32 to vector<8x128xi32>
    %11 = arith.cmpi eq, %7, %10 : vector<8x128xi32>
    %cst_6 = arith.constant 0.000000e+00 : f32
    %12 = vector.broadcast %cst_6 : f32 to vector<8x128xf32>
    %13 = arith.select %11, %6, %12 : vector<8x128xi1>, vector<8x128xf32>
    %14 = arith.select %9, %4, %13 : vector<8x128xi1>, vector<8x128xf32>
    %c0_7 = arith.constant 0 : index
    %c0_8 = arith.constant 0 : index
    %15 = vector.load %arg3[%c0_7, %c0_8] : memref<8x128xf32, #tpu.memory_space<vmem>>, vector<8x128xf32>
    tpu.vector_store %arg3[%c0_7, %c0_8], %14 {strides = array<i32>} : memref<8x128xf32, #tpu.memory_space<vmem>>, vector<8x128xf32>,
    return
  }
  func.func @transform_0(%arg0: i32) -> (i32, i32) {
    %c0_i32 = arith.constant 0 : i32
    %c0_i32_0 = arith.constant 0 : i32
    return %arg0, %c0_i32 : i32, i32
  }
  func.func @transform_1(%arg0: i32) -> (i32, i32) {
    %c0_i32 = arith.constant 0 : i32
    %c0_i32_0 = arith.constant 0 : i32
    %c0_i32_1 = arith.constant 0 : i32
    return %c0_i32, %c0_i32_0 : i32, i32
  }
  func.func @transform_2(%arg0: i32) -> (i32, i32) {
    %c0_i32 = arith.constant 0 : i32
    %c0_i32_0 = arith.constant 0 : i32
    return %arg0, %c0_i32 : i32, i32
  }
}

module attributes {stable_mosaic.version = 11 : i64} {
  func.func @_conv_bn_prelu_kernel(%arg0: i32, %arg1: memref<128x36xbf16, #tpu.memory_space<vmem>>, %arg2: memref<36x128xbf16, #tpu.memory_space<vmem>>, %arg3: memref<8x128xf32, #tpu.memory_space<vmem>>, %arg4: memref<128x8xf32, #tpu.memory_space<vmem>>) attributes {dimension_semantics = [#tpu.dimension_semantics<parallel>], iteration_bounds = array<i64: 4>, scalar_prefetch = 0 : i64, scratch_operands = 0 : i64, tpu.core_type = #tpu.core_type<tc>, window_params = [{transform_indices = @transform_0, window_bounds = array<i64: 128, 36>}, {pipeline_mode = #tpu.pipeline_mode<synchronous>, transform_indices = @transform_1, window_bounds = array<i64: 36, 128>}, {pipeline_mode = #tpu.pipeline_mode<synchronous>, transform_indices = @transform_2, window_bounds = array<i64: 8, 128>}, {transform_indices = @transform_3, window_bounds = array<i64: 128, 8>}]} {
    %c0 = arith.constant 0 : index
    %c0_0 = arith.constant 0 : index
    %0 = vector.load %arg1[%c0, %c0_0] : memref<128x36xbf16, #tpu.memory_space<vmem>>, vector<128x36xbf16>
    %c0_1 = arith.constant 0 : index
    %c0_2 = arith.constant 0 : index
    %1 = vector.load %arg2[%c0_1, %c0_2] : memref<36x128xbf16, #tpu.memory_space<vmem>>, vector<36x128xbf16>
    %cst = arith.constant dense<0.000000e+00> : vector<128x128xf32>
    %2 = tpu.matmul %0, %1, %cst {dimension_numbers = #tpu.dot_dimension_numbers<[1], [0], [0], [1], [0, 0, 1, 1], [], []>} : vector<128x36xbf16>, vector<36x128xbf16>, vector<128x128xf32> -> vector<128x128xf32>
    %c0_3 = arith.constant 0 : index
    %c0_4 = arith.constant 0 : index
    %3 = vector.load %arg3[%c0_3, %c0_4] : memref<8x128xf32, #tpu.memory_space<vmem>>, vector<1x128xf32>
    %c1 = arith.constant 1 : index
    %c0_5 = arith.constant 0 : index
    %4 = vector.load %arg3[%c1, %c0_5] : memref<8x128xf32, #tpu.memory_space<vmem>>, vector<1x128xf32>
    %c2 = arith.constant 2 : index
    %c0_6 = arith.constant 0 : index
    %5 = vector.load %arg3[%c2, %c0_6] : memref<8x128xf32, #tpu.memory_space<vmem>>, vector<1x128xf32>
    %6 = vector.broadcast %3 : vector<1x128xf32> to vector<128x128xf32>
    %7 = arith.mulf %2, %6 : vector<128x128xf32>
    %8 = vector.broadcast %4 : vector<1x128xf32> to vector<128x128xf32>
    %9 = arith.addf %7, %8 : vector<128x128xf32>
    %cst_7 = arith.constant 0.000000e+00 : f32
    %10 = vector.broadcast %cst_7 : f32 to vector<128x128xf32>
    %11 = arith.cmpf oge, %9, %10 : vector<128x128xf32>
    %12 = vector.broadcast %5 : vector<1x128xf32> to vector<128x128xf32>
    %13 = arith.mulf %12, %9 : vector<128x128xf32>
    %14 = arith.select %11, %9, %13 : vector<128x128xi1>, vector<128x128xf32>
    %15 = vector.extract_strided_slice %14 {offsets = [0, 0], sizes = [128, 8], strides = [1, 1]} : vector<128x128xf32> to vector<128x8xf32>
    %c0_8 = arith.constant 0 : index
    %c0_9 = arith.constant 0 : index
    %16 = vector.load %arg4[%c0_8, %c0_9] : memref<128x8xf32, #tpu.memory_space<vmem>>, vector<128x8xf32>
    tpu.vector_store %arg4[%c0_8, %c0_9], %15 {strides = array<i32>} : memref<128x8xf32, #tpu.memory_space<vmem>>, vector<128x8xf32>,
    return
  }
  func.func @transform_0(%arg0: i32) -> (i32, i32) {
    %c0_i32 = arith.constant 0 : i32
    %c0_i32_0 = arith.constant 0 : i32
    return %arg0, %c0_i32 : i32, i32
  }
  func.func @transform_1(%arg0: i32) -> (i32, i32) {
    %c0_i32 = arith.constant 0 : i32
    %c0_i32_0 = arith.constant 0 : i32
    %c0_i32_1 = arith.constant 0 : i32
    return %c0_i32, %c0_i32_0 : i32, i32
  }
  func.func @transform_2(%arg0: i32) -> (i32, i32) {
    %c0_i32 = arith.constant 0 : i32
    %c0_i32_0 = arith.constant 0 : i32
    %c0_i32_1 = arith.constant 0 : i32
    return %c0_i32, %c0_i32_0 : i32, i32
  }
  func.func @transform_3(%arg0: i32) -> (i32, i32) {
    %c0_i32 = arith.constant 0 : i32
    %c0_i32_0 = arith.constant 0 : i32
    return %arg0, %c0_i32 : i32, i32
  }
}

</mosaic_0001>

<llo_original>
// kernel: conv_block_forward.2
$region0: #{conv_block_forward.2}
  #allocation0 [shape = 'u32[]', space=smem, size = 0x4, offset = 0x4, fixed_abs, tag = 'smem constant byte address 0x4 - core index']
  #allocation1 [shape = 'u32[144,128]{1,0:T(1,128)}', space=vmem, size = 0x12000, scoped, tag = 'internal scratch']
  %s0 = inlined_call_operand.vmem [shape: bf16[512,36], index: 0, kind: input, shape index: {}]
  %s1 = inlined_call_operand.vmem [shape: bf16[36,128], index: 1, kind: input, shape index: {}]
  %s2 = inlined_call_operand.vmem [shape: f32[32,128], index: 2, kind: output, shape index: {}]
  %s3 = sld [smem:[#allocation0]]
  $region41: #{conv_block_forward.2} parent=0
    _
  %s5 = ssub.s32 1, %s3
  %s6 = scalar_select 0, %s5, %s3
  loop: start=0, step=1, limit=6
  $region2: #{conv_block_forward.2} parent=0 // loop_pre_header
    _
  $region3: #{conv_block_forward.2} parent=0 // loop_header
    %s8 = sphi 0, %s12
    %p9 = scmp.ge.s32.totalorder %s8, 6
    %s18 = sphi 0, %s20
    %s21 = sphi 0, %s18
    %s22 = sphi 0, %s21
    %s38 = sphi 0, %s22
    %s42 = sphi 0, %s42
    %s44 = sphi 0, %s42
    %s45 = sphi 0, %s44
    %s59 = sphi 0, %s45
    %s65 = sphi 0, %s67
    %s68 = sphi 0, %s65
    %s69 = sphi 0, %s68
    %s85 = sphi 0, %s69
  $region4: #{conv_block_forward.2} parent=0 // loop_header_branch
    %11 = sbr.rel (%p9) target = $region8
  $region5: #{conv_block_forward.2} parent=0 // loop_body
    %s13 = ssub.s32 %s8, 1
    %s14 = ssub.s32 %s8, 2
    %s15 = sadd.s32 %s8, 1
    %s16 = ssub.s32 %s8, %s15
    %p17 = scmp.eq.s32.totalorder %s16, 0
    %s19 = sadd.s32 %s18, 1
    %s20 = scalar_select %p17, %s18, %s19
    %p23 = pneg %p17
    %p24 = scmp.eq.s32.totalorder %s8, 3
    %p25 = por %p23, %p24
    %p26 = scmp.ne.s32.totalorder %s18, %s21
    %p27 = scmp.eq.s32.totalorder %s8, 0
    %p28 = por %p26, %p27
    %p29 = scmp.ne.s32.totalorder %s18, %s21
    %p30 = scmp.eq.s32.totalorder %s13, 3
    %p31 = por %p29, %p30
    %p32 = scmp.ne.s32.totalorder %s21, %s22
    %p33 = scmp.eq.s32.totalorder %s13, 0
    %p34 = por %p32, %p33
    %p35 = scmp.ne.s32.totalorder %s21, %s22
    %p36 = scmp.eq.s32.totalorder %s14, 3
    %p37 = por %p35, %p36
    %p39 = scmp.ne.s32.totalorder %s22, %s38
    %p40 = scmp.eq.s32.totalorder %s14, 0
    %p41 = por %p39, %p40
    %s43 = sadd.s32 %s42, 1
    %p46 = scmp.eq.s32.totalorder %s8, 3
    %p47 = scmp.ne.s32.totalorder %s42, %s44
    %p48 = scmp.eq.s32.totalorder %s8, 0
    %p49 = por %p47, %p48
    %p50 = scmp.ne.s32.totalorder %s42, %s44
    %p51 = scmp.eq.s32.totalorder %s13, 3
    %p52 = por %p50, %p51
    %p53 = scmp.ne.s32.totalorder %s44, %s45
    %p54 = scmp.eq.s32.totalorder %s13, 0
    %p55 = por %p53, %p54
    %p56 = scmp.ne.s32.totalorder %s44, %s45
    %p57 = scmp.eq.s32.totalorder %s14, 3
    %p58 = por %p56, %p57
    %p60 = scmp.ne.s32.totalorder %s45, %s59
    %p61 = scmp.eq.s32.totalorder %s14, 0
    %p62 = por %p60, %p61
    %s63 = ssub.s32 %s8, %s15
    %p64 = scmp.eq.s32.totalorder %s63, 0
    %s66 = sadd.s32 %s65, 1
    %s67 = scalar_select %p64, %s65, %s66
    %p70 = pneg %p64
    %p71 = scmp.eq.s32.totalorder %s8, 3
    %p72 = por %p70, %p71
    %p73 = scmp.ne.s32.totalorder %s65, %s68
    %p74 = scmp.eq.s32.totalorder %s8, 0
    %p75 = por %p73, %p74
    %p76 = scmp.ne.s32.totalorder %s65, %s68
    %p77 = scmp.eq.s32.totalorder %s13, 3
    %p78 = por %p76, %p77
    %p79 = scmp.ne.s32.totalorder %s68, %s69
    %p80 = scmp.eq.s32.totalorder %s13, 0
    %p81 = por %p79, %p80
    %p82 = scmp.ne.s32.totalorder %s68, %s69
    %p83 = scmp.eq.s32.totalorder %s14, 3
    %p84 = por %p82, %p83
    %p86 = scmp.ne.s32.totalorder %s69, %s85
    %p87 = scmp.eq.s32.totalorder %s14, 0
    %p88 = por %p86, %p87
    %p89 = scmp.le.s32.totalorder 1, %s8
    %p90 = scmp.lt.s32.totalorder %s8, 5
    %p91 = pnand %p89, %p90
    %p92 = pneg %p91
    // Predicated region
    $region9: #{conv_block_forward.2} parent=5 // pred_check
      _
    $region10: #{conv_block_forward.2} parent=5 // pred_check_branch
      %94 = sbr.rel (%p91) target = $region12
    $region11: #{conv_block_forward.2} parent=5 // pred_region
      %s95 = ssub.s32 %s8, 1
      // Predicated region
      $region13: #{conv_block_forward.2} parent=11 // pred_check
        %p96 = pneg %p55
      $region14: #{conv_block_forward.2} parent=11 // pred_check_branch
        %98 = sbr.rel (%p96) target = $region16
      $region15: #{conv_block_forward.2} parent=11 // pred_region
        _
      $region16: #{conv_block_forward.2} parent=11 // pred_fallthru
        _
    $region12: #{conv_block_forward.2} parent=5 // pred_fallthru
      _
    %p99 = scmp.lt.s32.totalorder %s8, 4
    // Predicated region
    $region17: #{conv_block_forward.2} parent=5 // pred_check
      %p100 = pneg %p99
    $region18: #{conv_block_forward.2} parent=5 // pred_check_branch
      %102 = sbr.rel (%p100) target = $region20
    $region19: #{conv_block_forward.2} parent=5 // pred_region
      // Predicated region
      $region21: #{conv_block_forward.2} parent=19 // pred_check
        %p103 = pneg %p28
      $region22: #{conv_block_forward.2} parent=19 // pred_check_branch
        %105 = sbr.rel (%p103) target = $region24
      $region23: #{conv_block_forward.2} parent=19 // pred_region
        %s106 = smul.u32 16, %s8
        %p107 = scmp.lt.s32.totalorder %s106, 63
        %s108 = scalar_select %p107, %s106, 63
        %s109 = smul.addr %s108, 4
        %s110 = scalar_lea.vmem %s0, %s109
        %s111 = smul.u32 16, %s8
      $region24: #{conv_block_forward.2} parent=19 // pred_fallthru
        _
    $region20: #{conv_block_forward.2} parent=5 // pred_fallthru
      _
    %p112 = scmp.le.s32.totalorder 1, %s8
    %p113 = scmp.lt.s32.totalorder %s8, 5
    %p114 = pnand %p112, %p113
    %p115 = pneg %p114
    // Predicated region
    $region25: #{conv_block_forward.2} parent=5 // pred_check
      _
    $region26: #{conv_block_forward.2} parent=5 // pred_check_branch
      %117 = sbr.rel (%p114) target = $region28
    $region27: #{conv_block_forward.2} parent=5 // pred_region
      %s118 = ssub.s32 %s8, 1
      %s119 = smul.u32 16, %s13
      %p120 = scmp.lt.s32.totalorder %s119, 63
      %s121 = scalar_select %p120, %s119, 63
      %s122 = smul.addr %s121, 4
      %s123 = scalar_lea.vmem %s0, %s122
      %p124 = pneg %p34
      %p125 = pneg %p31
      %p126 = pneg %p55
      %p127 = pneg %p52
      %p128 = pneg %p81
      %p129 = pneg %p78
      %p130 = scmp.lt.s32.totalorder %s13, 3
      %s131 = scalar_select %p130, %s13, 3
      %s132 = smul.addr %s131, 8
      %s133 = scalar_lea.vmem %s2, %s132
      %s134 = smul.u32 16, %s13
      %p135 = scmp.lt.s32.totalorder %s134, 63
      %s136 = scalar_select %p135, %s134, 63
      %s137 = smul.addr %s136, 4
      %s138 = scalar_lea.vmem %s0, %s137
      %s139 = smul.u32 16, %s13
      %p140 = scmp.lt.s32.totalorder %s13, 3
      %s141 = scalar_select %p140, %s13, 3
      %s142 = smul.addr %s141, 8
      %s143 = scalar_lea.vmem %s2, %s142
      %v145 = vld [vmem:[%s138] sm:$0xf]
      %v146 = vld [vmem:[%s138 + $0x4] sm:$0xf]
      %v147 = vld [vmem:[%s138 + $0x8] sm:$0xf]
      %v148 = vld [vmem:[%s138 + $0xc] sm:$0xf]
      %v149 = vld [vmem:[%s138 + $0x10] sm:$0xf]
      %v150 = vld [vmem:[%s138 + $0x14] sm:$0xf]
      %v151 = vld [vmem:[%s138 + $0x18] sm:$0xf]
      %v152 = vld [vmem:[%s138 + $0x1c] sm:$0xf]
      %v153 = vld [vmem:[%s138 + $0x20] sm:$0xf]
      %v154 = vld [vmem:[%s138 + $0x24] sm:$0xf]
      %v155 = vld [vmem:[%s138 + $0x28] sm:$0xf]
      %v156 = vld [vmem:[%s138 + $0x2c] sm:$0xf]
      %v157 = vld [vmem:[%s138 + $0x30] sm:$0xf]
      %v158 = vld [vmem:[%s138 + $0x34] sm:$0xf]
      %v159 = vld [vmem:[%s138 + $0x38] sm:$0xf]
      %v160 = vld [vmem:[%s138 + $0x3c] sm:$0xf]
      %v161 = vld [vmem:[%s1] sm:$0xf]
      %v162 = vld [vmem:[%s1 + $0x4] sm:$0xf]
      %v163 = vld [vmem:[%s1 + $0x8] sm:$0xf]
      %v164 = vld [vmem:[%s1 + $0xc] sm:$0xf]
      %v165 = vld [vmem:[%s1 + $0x10] sm:$0x3]
      %v182 = vunpack.c.l.b16 %v145
      %v183 = vunpack.c.l.b16 %v146
      %v184 = vunpack.c.l.b16 %v147
      %v185 = vunpack.c.l.b16 %v148
      %v186 = vunpack.c.l.b16 %v149
      %v187 = vunpack.c.l.b16 %v150
      %v188 = vunpack.c.l.b16 %v151
      %v189 = vunpack.c.l.b16 %v152
      %v190 = vunpack.c.l.b16 %v153
      %v191 = vunpack.c.l.b16 %v154
      %v192 = vunpack.c.l.b16 %v155
      %v193 = vunpack.c.l.b16 %v156
      %v194 = vunpack.c.l.b16 %v157
      %v195 = vunpack.c.l.b16 %v158
      %v196 = vunpack.c.l.b16 %v159
      %v197 = vunpack.c.l.b16 %v160
      %v198 = vpack.c.b16 %v183, %v182
      %v199 = vpack.c.b16 %v185, %v184
      %v200 = vpack.c.b16 %v187, %v186
      %v201 = vpack.c.b16 %v189, %v188
      %v202 = vpack.c.b16 %v191, %v190
      %v203 = vpack.c.b16 %v193, %v192
      %v204 = vpack.c.b16 %v195, %v194
      %v205 = vpack.c.b16 %v197, %v196
      %v211 = vunpack.c.l.b16 %v161
      %v212 = vunpack.c.l.b16 %v162
      %v213 = vunpack.c.l.b16 %v163
      %v214 = vunpack.c.l.b16 %v164
      %v215 = vunpack.c.l.b16 %v165
      %v216 = vpack.c.b16 %v212, %v211
      %v217 = vpack.c.b16 %v214, %v213
      %v218 = vpack.c.b16 %v215, %v215
      %vm221 = vcmask 293888
      %v223 = vsel %vm221, %v198, 0
      %v226 = vsel %vm221, %v199, 0
      %v229 = vsel %vm221, %v200, 0
      %v232 = vsel %vm221, %v201, 0
      %v235 = vsel %vm221, %v202, 0
      %v238 = vsel %vm221, %v203, 0
      %v241 = vsel %vm221, %v204, 0
      %v244 = vsel %vm221, %v205, 0
      %vm246 = vcmask 1041408
      %v248 = vsel %vm246, %v218, 0
      %250 = vmatprep.subr.bf16.mxu0 0
      %251 = vmatpush1.bf16.msra.mxu0 %v216
      %252 = vmatprep.subr.bf16.mxu0 0
      %253 = vmatpush1.bf16.msra.mxu0 %v217
      %254 = vmatprep.subr.bf16.mxu0 0
      %255 = vmatpush1.bf16.msra.mxu0 %v248
      %256 = vmatprep.subr.bf16.mxu0 0
      %257 = vmatpush1.bf16.msra.mxu0 0
      %258 = vmatprep.subr.bf16.mxu0 0
      %259 = vmatpush1.bf16.msra.mxu0 0
      %260 = vmatprep.subr.bf16.mxu0 0
      %261 = vmatpush1.bf16.msra.mxu0 0
      %262 = vmatprep.subr.bf16.mxu0 0
      %263 = vmatpush1.bf16.msra.mxu0 0
      %264 = vmatprep.subr.bf16.mxu0 0
      %265 = vmatpush1.bf16.msra.mxu0 0
      %266 = vmatprep.subr.bf16.mxu0 0
      %267 = vmatpush1.bf16.msra.mxu0 0
      %268 = vmatprep.subr.bf16.mxu0 0
      %269 = vmatpush1.bf16.msra.mxu0 0
      %270 = vmatprep.subr.bf16.mxu0 0
      %271 = vmatpush1.bf16.msra.mxu0 0
      %272 = vmatprep.subr.bf16.mxu0 0
      %273 = vmatpush1.bf16.msra.mxu0 0
      %274 = vmatprep.subr.bf16.mxu0 0
      %275 = vmatpush1.bf16.msra.mxu0 0
      %276 = vmatprep.subr.bf16.mxu0 0
      %277 = vmatpush1.bf16.msra.mxu0 0
      %278 = vmatprep.subr.bf16.mxu0 0
      %279 = vmatpush1.bf16.msra.mxu0 0
      %280 = vmatprep.subr.bf16.mxu0 0
      %281 = vmatpush1.bf16.msra.mxu0 0
      %282 = vmatprep.mubr.bf16.mxu0 0
      %283 = vmatmul.mubr.bf16.gmra.mrb[0].mxu0 %v223
      %v284 = vpop.f32.mrb[0].mxu0
      %v285 = vadd.f32 0.0, %v284
      %v286 = vpop.f32.mrb[0].mxu0
      %v287 = vpop.f32.mrb[0].mxu0
      %v288 = vadd.f32 0.0, %v287
      %v289 = vpop.f32.mrb[0].mxu0
      %290 = vmatprep.mubr.bf16.mxu0 0
      %291 = vmatmul.mubr.bf16.gmra.mrb[0].mxu0 %v226
      %v292 = vpop.f32.mrb[0].mxu0
      %v293 = vadd.f32 0.0, %v292
      %v294 = vpop.f32.mrb[0].mxu0
      %v295 = vpop.f32.mrb[0].mxu0
      %v296 = vadd.f32 0.0, %v295
      %v297 = vpop.f32.mrb[0].mxu0
      %298 = vmatprep.mubr.bf16.mxu0 0
      %299 = vmatmul.mubr.bf16.gmra.mrb[0].mxu0 %v229
      %v300 = vpop.f32.mrb[0].mxu0
      %v301 = vadd.f32 0.0, %v300
      %v302 = vpop.f32.mrb[0].mxu0
      %v303 = vpop.f32.mrb[0].mxu0
      %v304 = vadd.f32 0.0, %v303
      %v305 = vpop.f32.mrb[0].mxu0
      %306 = vmatprep.mubr.bf16.mxu0 0
      %307 = vmatmul.mubr.bf16.gmra.mrb[0].mxu0 %v232
      %v308 = vpop.f32.mrb[0].mxu0
      %v309 = vadd.f32 0.0, %v308
      %v310 = vpop.f32.mrb[0].mxu0
      %v311 = vpop.f32.mrb[0].mxu0
      %v312 = vadd.f32 0.0, %v311
      %v313 = vpop.f32.mrb[0].mxu0
      %314 = vmatprep.mubr.bf16.mxu0 0
      %315 = vmatmul.mubr.bf16.gmra.mrb[0].mxu0 %v235
      %v316 = vpop.f32.mrb[0].mxu0
      %v317 = vadd.f32 0.0, %v316
      %v318 = vpop.f32.mrb[0].mxu0
      %v319 = vpop.f32.mrb[0].mxu0
      %v320 = vadd.f32 0.0, %v319
      %v321 = vpop.f32.mrb[0].mxu0
      %322 = vmatprep.mubr.bf16.mxu0 0
      %323 = vmatmul.mubr.bf16.gmra.mrb[0].mxu0 %v238
      %v324 = vpop.f32.mrb[0].mxu0
      %v325 = vadd.f32 0.0, %v324
      %v326 = vpop.f32.mrb[0].mxu0
      %v327 = vpop.f32.mrb[0].mxu0
      %v328 = vadd.f32 0.0, %v327
      %v329 = vpop.f32.mrb[0].mxu0
      %330 = vmatprep.mubr.bf16.mxu0 0
      %331 = vmatmul.mubr.bf16.gmra.mrb[0].mxu0 %v241
      %v332 = vpop.f32.mrb[0].mxu0
      %v333 = vadd.f32 0.0, %v332
      %v334 = vpop.f32.mrb[0].mxu0
      %v335 = vpop.f32.mrb[0].mxu0
      %v336 = vadd.f32 0.0, %v335
      %v337 = vpop.f32.mrb[0].mxu0
      %338 = vmatprep.mubr.bf16.mxu0 0
      %339 = vmatmul.mubr.bf16.gmra.mrb[0].mxu0 %v244
      %v340 = vpop.f32.mrb[0].mxu0
      %v341 = vadd.f32 0.0, %v340
      %v342 = vpop.f32.mrb[0].mxu0
      %v343 = vpop.f32.mrb[0].mxu0
      %v344 = vadd.f32 0.0, %v343
      %v345 = vpop.f32.mrb[0].mxu0
      %346 = vdwg.mxu0
      %347 = vmatprep.subr.mxu0 0.0
      %348 = vmatpush1.msra.mxu0 %v285
      %349 = vmatprep.subr.mxu0 0.0
      %350 = vmatpush1.msra.mxu0 %v288
      %351 = vmatprep.subr.mxu0 0.0
      %352 = vmatpush1.msra.mxu0 %v293
      %353 = vmatprep.subr.mxu0 0.0
      %354 = vmatpush1.msra.mxu0 %v296
      %355 = vmatprep.subr.mxu0 0.0
      %356 = vmatpush1.msra.mxu0 %v301
      %357 = vmatprep.subr.mxu0 0.0
      %358 = vmatpush1.msra.mxu0 %v304
      %359 = vmatprep.subr.mxu0 0.0
      %360 = vmatpush1.msra.mxu0 %v309
      %361 = vmatprep.subr.mxu0 0.0
      %362 = vmatpush1.msra.mxu0 %v312
      %363 = vmatprep.subr.mxu0 0.0
      %364 = vmatpush1.msra.mxu0 %v317
      %365 = vmatprep.subr.mxu0 0.0
      %366 = vmatpush1.msra.mxu0 %v320
      %367 = vmatprep.subr.mxu0 0.0
      %368 = vmatpush1.msra.mxu0 %v325
      %369 = vmatprep.subr.mxu0 0.0
      %370 = vmatpush1.msra.mxu0 %v328
      %371 = vmatprep.subr.mxu0 0.0
      %372 = vmatpush1.msra.mxu0 %v333
      %373 = vmatprep.subr.mxu0 0.0
      %374 = vmatpush1.msra.mxu0 %v336
      %375 = vmatprep.subr.mxu0 0.0
      %376 = vmatpush1.msra.mxu0 %v341
      %377 = vmatprep.subr.mxu0 0.0
      %378 = vmatpush1.msra.mxu0 %v344
      %379 = vmatprep.subr.mxu0 0.0
      %380 = vmatpush1.msra.mxu0 0.0
      %381 = vmatprep.subr.mxu0 0.0
      %382 = vmatpush1.msra.mxu0 0.0
      %383 = vmatprep.subr.mxu0 0.0
      %384 = vmatpush1.msra.mxu0 0.0
      %385 = vmatprep.subr.mxu0 0.0
      %386 = vmatpush1.msra.mxu0 0.0
      %387 = vmatprep.subr.mxu0 0.0
      %388 = vmatpush1.msra.mxu0 0.0
      %389 = vmatprep.subr.mxu0 0.0
      %390 = vmatpush1.msra.mxu0 0.0
      %391 = vmatprep.subr.mxu0 0.0
      %392 = vmatpush1.msra.mxu0 0.0
      %393 = vmatprep.subr.mxu0 0.0
      %394 = vmatpush1.msra.mxu0 0.0
      %395 = vmatprep.subr.mxu0 0.0
      %396 = vmatpush1.msra.mxu0 0.0
      %397 = vmatprep.subr.mxu0 0.0
      %398 = vmatpush1.msra.mxu0 0.0
      %399 = vmatprep.subr.mxu0 0.0
      %400 = vmatpush1.msra.mxu0 0.0
      %401 = vmatprep.subr.mxu0 0.0
      %402 = vmatpush1.msra.mxu0 0.0
      %403 = vmatprep.subr.mxu0 0.0
      %404 = vmatpush1.msra.mxu0 0.0
      %405 = vmatprep.subr.mxu0 0.0
      %406 = vmatpush1.msra.mxu0 0.0
      %407 = vmatprep.subr.mxu0 0.0
      %408 = vmatpush1.msra.mxu0 0.0
      %409 = vmatprep.subr.mxu0 0.0
      %410 = vmatpush1.msra.mxu0 0.0
      %411 = vmatprep.mubr.f32.mxu0 0.0
      %412 = vmatmul.mubr.f32.gmra.mrb[0].mxu0 1.0
      %v413 = vpop.f32.mrb[0].mxu0
      %v414 = vadd.f32 0.0, %v413
      %v415 = vpop.f32.mrb[0].mxu0
      %416 = vdwg.mxu0
      %v417 = vmul.f32 %v285, %v285
      %v418 = vmul.f32 %v288, %v288
      %v419 = vmul.f32 %v293, %v293
      %v420 = vmul.f32 %v296, %v296
      %v421 = vmul.f32 %v301, %v301
      %v422 = vmul.f32 %v304, %v304
      %v423 = vmul.f32 %v309, %v309
      %v424 = vmul.f32 %v312, %v312
      %v425 = vmul.f32 %v317, %v317
      %v426 = vmul.f32 %v320, %v320
      %v427 = vmul.f32 %v325, %v325
      %v428 = vmul.f32 %v328, %v328
      %v429 = vmul.f32 %v333, %v333
      %v430 = vmul.f32 %v336, %v336
      %v431 = vmul.f32 %v341, %v341
      %v432 = vmul.f32 %v344, %v344
      %433 = vmatprep.subr.mxu0 0.0
      %434 = vmatpush1.msra.mxu0 %v417
      %435 = vmatprep.subr.mxu0 0.0
      %436 = vmatpush1.msra.mxu0 %v418
      %437 = vmatprep.subr.mxu0 0.0
      %438 = vmatpush1.msra.mxu0 %v419
      %439 = vmatprep.subr.mxu0 0.0
      %440 = vmatpush1.msra.mxu0 %v420
      %441 = vmatprep.subr.mxu0 0.0
      %442 = vmatpush1.msra.mxu0 %v421
      %443 = vmatprep.subr.mxu0 0.0
      %444 = vmatpush1.msra.mxu0 %v422
      %445 = vmatprep.subr.mxu0 0.0
      %446 = vmatpush1.msra.mxu0 %v423
      %447 = vmatprep.subr.mxu0 0.0
      %448 = vmatpush1.msra.mxu0 %v424
      %449 = vmatprep.subr.mxu0 0.0
      %450 = vmatpush1.msra.mxu0 %v425
      %451 = vmatprep.subr.mxu0 0.0
      %452 = vmatpush1.msra.mxu0 %v426
      %453 = vmatprep.subr.mxu0 0.0
      %454 = vmatpush1.msra.mxu0 %v427
      %455 = vmatprep.subr.mxu0 0.0
      %456 = vmatpush1.msra.mxu0 %v428
      %457 = vmatprep.subr.mxu0 0.0
      %458 = vmatpush1.msra.mxu0 %v429
      %459 = vmatprep.subr.mxu0 0.0
      %460 = vmatpush1.msra.mxu0 %v430
      %461 = vmatprep.subr.mxu0 0.0
      %462 = vmatpush1.msra.mxu0 %v431
      %463 = vmatprep.subr.mxu0 0.0
      %464 = vmatpush1.msra.mxu0 %v432
      %465 = vmatprep.subr.mxu0 0.0
      %466 = vmatpush1.msra.mxu0 0.0
      %467 = vmatprep.subr.mxu0 0.0
      %468 = vmatpush1.msra.mxu0 0.0
      %469 = vmatprep.subr.mxu0 0.0
      %470 = vmatpush1.msra.mxu0 0.0
      %471 = vmatprep.subr.mxu0 0.0
      %472 = vmatpush1.msra.mxu0 0.0
      %473 = vmatprep.subr.mxu0 0.0
      %474 = vmatpush1.msra.mxu0 0.0
      %475 = vmatprep.subr.mxu0 0.0
      %476 = vmatpush1.msra.mxu0 0.0
      %477 = vmatprep.subr.mxu0 0.0
      %478 = vmatpush1.msra.mxu0 0.0
      %479 = vmatprep.subr.mxu0 0.0
      %480 = vmatpush1.msra.mxu0 0.0
      %481 = vmatprep.subr.mxu0 0.0
      %482 = vmatpush1.msra.mxu0 0.0
      %483 = vmatprep.subr.mxu0 0.0
      %484 = vmatpush1.msra.mxu0 0.0
      %485 = vmatprep.subr.mxu0 0.0
      %486 = vmatpush1.msra.mxu0 0.0
      %487 = vmatprep.subr.mxu0 0.0
      %488 = vmatpush1.msra.mxu0 0.0
      %489 = vmatprep.subr.mxu0 0.0
      %490 = vmatpush1.msra.mxu0 0.0
      %491 = vmatprep.subr.mxu0 0.0
      %492 = vmatpush1.msra.mxu0 0.0
      %493 = vmatprep.subr.mxu0 0.0
      %494 = vmatpush1.msra.mxu0 0.0
      %495 = vmatprep.subr.mxu0 0.0
      %496 = vmatpush1.msra.mxu0 0.0
      %497 = vmatprep.mubr.f32.mxu0 0.0
      %498 = vmatmul.mubr.f32.gmra.mrb[0].mxu0 1.0
      %v499 = vpop.f32.mrb[0].mxu0
      %v500 = vadd.f32 0.0, %v499
      %v501 = vpop.f32.mrb[0].mxu0
      %502 = vdwg.mxu0
      %v503 = vlaneseq
      %v504 = vshrl.u32 %v503, 7
      %vm505 = vcmp.eq.s32.totalorder %v504, 0
      %vm506 = vcmp.eq.s32.totalorder %v504, 1
      %v507 = vsel %vm506, %v500, 0.0
      %v508 = vsel %vm505, %v414, %v507
      %509 = vst [vmem:[%s143] sm:$0xff] %v508
      %p510 = scmp.lt.s32.totalorder %s13, 3
      %s511 = scalar_select %p510, %s13, 3
      %s512 = smul.addr %s511, 8
      %s513 = scalar_lea.vmem %s2, %s512
      // Predicated region
      $region29: #{conv_block_forward.2} parent=27 // pred_check
        %p514 = pneg %p78
      $region30: #{conv_block_forward.2} parent=27 // pred_check_branch
        %516 = sbr.rel (%p514) target = $region32
      $region31: #{conv_block_forward.2} parent=27 // pred_region
        _
      $region32: #{conv_block_forward.2} parent=27 // pred_fallthru
        _
    $region28: #{conv_block_forward.2} parent=5 // pred_fallthru
      _
    %p517 = scmp.le.s32.totalorder 2, %s8
    // Predicated region
    $region33: #{conv_block_forward.2} parent=5 // pred_check
      %p518 = pneg %p517
    $region34: #{conv_block_forward.2} parent=5 // pred_check_branch
      %520 = sbr.rel (%p518) target = $region36
    $region35: #{conv_block_forward.2} parent=5 // pred_region
      %s521 = ssub.s32 %s8, 2
      // Predicated region
      $region37: #{conv_block_forward.2} parent=35 // pred_check
        %p522 = pneg %p84
      $region38: #{conv_block_forward.2} parent=35 // pred_check_branch
        %524 = sbr.rel (%p522) target = $region40
      $region39: #{conv_block_forward.2} parent=35 // pred_region
        %p525 = scmp.lt.s32.totalorder %s14, 3
        %s526 = scalar_select %p525, %s14, 3
        %s527 = smul.addr %s526, 8
        %s528 = scalar_lea.vmem %s2, %s527
      $region40: #{conv_block_forward.2} parent=35 // pred_fallthru
        _
    $region36: #{conv_block_forward.2} parent=5 // pred_fallthru
      _
  $region6: #{conv_block_forward.2} parent=0 // loop_footer
    %s12 = sadd.s32 1, %s8
  $region7: #{conv_block_forward.2} parent=0 // loop_footer_branch
    %7 = sbr.rel target = $region3
  $region8: #{conv_block_forward.2} parent=0 // loop_exit
    _

// kernel: conv_block_forward.3
$region0: #{conv_block_forward.3}
  #allocation0 [shape = 'u32[]', space=smem, size = 0x4, offset = 0x4, fixed_abs, tag = 'smem constant byte address 0x4 - core index']
  #allocation1 [shape = 'u32[144,128]{1,0:T(1,128)}', space=vmem, size = 0x12000, scoped, tag = 'internal scratch']
  %s0 = inlined_call_operand.vmem [shape: bf16[512,36], index: 0, kind: input, shape index: {}]
  %s1 = inlined_call_operand.vmem [shape: bf16[36,128], index: 1, kind: input, shape index: {}]
  %s2 = inlined_call_operand.vmem [shape: f32[8,128], index: 2, kind: input, shape index: {}]
  %s3 = inlined_call_operand.vmem [shape: f32[512,8], index: 3, kind: output, shape index: {}]
  %s4 = sld [smem:[#allocation0]]
  $region45: #{conv_block_forward.3} parent=0
    _
  %s6 = ssub.s32 1, %s4
  %s7 = scalar_select 0, %s6, %s4
  loop: start=0, step=1, limit=6
  $region2: #{conv_block_forward.3} parent=0 // loop_pre_header
    _
  $region3: #{conv_block_forward.3} parent=0 // loop_header
    %s9 = sphi 0, %s13
    %p10 = scmp.ge.s32.totalorder %s9, 6
    %s19 = sphi 0, %s21
    %s22 = sphi 0, %s19
    %s23 = sphi 0, %s22
    %s39 = sphi 0, %s23
    %s43 = sphi 0, %s43
    %s45 = sphi 0, %s43
    %s46 = sphi 0, %s45
    %s60 = sphi 0, %s46
    %s64 = sphi 0, %s64
    %s66 = sphi 0, %s64
    %s67 = sphi 0, %s66
    %s81 = sphi 0, %s67
    %s87 = sphi 0, %s89
    %s90 = sphi 0, %s87
    %s91 = sphi 0, %s90
    %s107 = sphi 0, %s91
  $region4: #{conv_block_forward.3} parent=0 // loop_header_branch
    %12 = sbr.rel (%p10) target = $region8
  $region5: #{conv_block_forward.3} parent=0 // loop_body
    %s14 = ssub.s32 %s9, 1
    %s15 = ssub.s32 %s9, 2
    %s16 = sadd.s32 %s9, 1
    %s17 = ssub.s32 %s9, %s16
    %p18 = scmp.eq.s32.totalorder %s17, 0
    %s20 = sadd.s32 %s19, 1
    %s21 = scalar_select %p18, %s19, %s20
    %p24 = pneg %p18
    %p25 = scmp.eq.s32.totalorder %s9, 3
    %p26 = por %p24, %p25
    %p27 = scmp.ne.s32.totalorder %s19, %s22
    %p28 = scmp.eq.s32.totalorder %s9, 0
    %p29 = por %p27, %p28
    %p30 = scmp.ne.s32.totalorder %s19, %s22
    %p31 = scmp.eq.s32.totalorder %s14, 3
    %p32 = por %p30, %p31
    %p33 = scmp.ne.s32.totalorder %s22, %s23
    %p34 = scmp.eq.s32.totalorder %s14, 0
    %p35 = por %p33, %p34
    %p36 = scmp.ne.s32.totalorder %s22, %s23
    %p37 = scmp.eq.s32.totalorder %s15, 3
    %p38 = por %p36, %p37
    %p40 = scmp.ne.s32.totalorder %s23, %s39
    %p41 = scmp.eq.s32.totalorder %s15, 0
    %p42 = por %p40, %p41
    %s44 = sadd.s32 %s43, 1
    %p47 = scmp.eq.s32.totalorder %s9, 3
    %p48 = scmp.ne.s32.totalorder %s43, %s45
    %p49 = scmp.eq.s32.totalorder %s9, 0
    %p50 = por %p48, %p49
    %p51 = scmp.ne.s32.totalorder %s43, %s45
    %p52 = scmp.eq.s32.totalorder %s14, 3
    %p53 = por %p51, %p52
    %p54 = scmp.ne.s32.totalorder %s45, %s46
    %p55 = scmp.eq.s32.totalorder %s14, 0
    %p56 = por %p54, %p55
    %p57 = scmp.ne.s32.totalorder %s45, %s46
    %p58 = scmp.eq.s32.totalorder %s15, 3
    %p59 = por %p57, %p58
    %p61 = scmp.ne.s32.totalorder %s46, %s60
    %p62 = scmp.eq.s32.totalorder %s15, 0
    %p63 = por %p61, %p62
    %s65 = sadd.s32 %s64, 1
    %p68 = scmp.eq.s32.totalorder %s9, 3
    %p69 = scmp.ne.s32.totalorder %s64, %s66
    %p70 = scmp.eq.s32.totalorder %s9, 0
    %p71 = por %p69, %p70
    %p72 = scmp.ne.s32.totalorder %s64, %s66
    %p73 = scmp.eq.s32.totalorder %s14, 3
    %p74 = por %p72, %p73
    %p75 = scmp.ne.s32.totalorder %s66, %s67
    %p76 = scmp.eq.s32.totalorder %s14, 0
    %p77 = por %p75, %p76
    %p78 = scmp.ne.s32.totalorder %s66, %s67
    %p79 = scmp.eq.s32.totalorder %s15, 3
    %p80 = por %p78, %p79
    %p82 = scmp.ne.s32.totalorder %s67, %s81
    %p83 = scmp.eq.s32.totalorder %s15, 0
    %p84 = por %p82, %p83
    %s85 = ssub.s32 %s9, %s16
    %p86 = scmp.eq.s32.totalorder %s85, 0
    %s88 = sadd.s32 %s87, 1
    %s89 = scalar_select %p86, %s87, %s88
    %p92 = pneg %p86
    %p93 = scmp.eq.s32.totalorder %s9, 3
    %p94 = por %p92, %p93
    %p95 = scmp.ne.s32.totalorder %s87, %s90
    %p96 = scmp.eq.s32.totalorder %s9, 0
    %p97 = por %p95, %p96
    %p98 = scmp.ne.s32.totalorder %s87, %s90
    %p99 = scmp.eq.s32.totalorder %s14, 3
    %p100 = por %p98, %p99
    %p101 = scmp.ne.s32.totalorder %s90, %s91
    %p102 = scmp.eq.s32.totalorder %s14, 0
    %p103 = por %p101, %p102
    %p104 = scmp.ne.s32.totalorder %s90, %s91
    %p105 = scmp.eq.s32.totalorder %s15, 3
    %p106 = por %p104, %p105
    %p108 = scmp.ne.s32.totalorder %s91, %s107
    %p109 = scmp.eq.s32.totalorder %s15, 0
    %p110 = por %p108, %p109
    %p111 = scmp.le.s32.totalorder 1, %s9
    %p112 = scmp.lt.s32.totalorder %s9, 5
    %p113 = pnand %p111, %p112
    %p114 = pneg %p113
    // Predicated region
    $region9: #{conv_block_forward.3} parent=5 // pred_check
      _
    $region10: #{conv_block_forward.3} parent=5 // pred_check_branch
      %116 = sbr.rel (%p113) target = $region12
    $region11: #{conv_block_forward.3} parent=5 // pred_region
      %s117 = ssub.s32 %s9, 1
      // Predicated region
      $region13: #{conv_block_forward.3} parent=11 // pred_check
        %p118 = pneg %p56
      $region14: #{conv_block_forward.3} parent=11 // pred_check_branch
        %120 = sbr.rel (%p118) target = $region16
      $region15: #{conv_block_forward.3} parent=11 // pred_region
        _
      $region16: #{conv_block_forward.3} parent=11 // pred_fallthru
        _
      // Predicated region
      $region17: #{conv_block_forward.3} parent=11 // pred_check
        %p121 = pneg %p77
      $region18: #{conv_block_forward.3} parent=11 // pred_check_branch
        %123 = sbr.rel (%p121) target = $region20
      $region19: #{conv_block_forward.3} parent=11 // pred_region
        _
      $region20: #{conv_block_forward.3} parent=11 // pred_fallthru
        _
    $region12: #{conv_block_forward.3} parent=5 // pred_fallthru
      _
    %p124 = scmp.lt.s32.totalorder %s9, 4
    // Predicated region
    $region21: #{conv_block_forward.3} parent=5 // pred_check
      %p125 = pneg %p124
    $region22: #{conv_block_forward.3} parent=5 // pred_check_branch
      %127 = sbr.rel (%p125) target = $region24
    $region23: #{conv_block_forward.3} parent=5 // pred_region
      // Predicated region
      $region25: #{conv_block_forward.3} parent=23 // pred_check
        %p128 = pneg %p29
      $region26: #{conv_block_forward.3} parent=23 // pred_check_branch
        %130 = sbr.rel (%p128) target = $region28
      $region27: #{conv_block_forward.3} parent=23 // pred_region
        %s131 = smul.u32 16, %s9
        %p132 = scmp.lt.s32.totalorder %s131, 63
        %s133 = scalar_select %p132, %s131, 63
        %s134 = smul.addr %s133, 4
        %s135 = scalar_lea.vmem %s0, %s134
        %s136 = smul.u32 16, %s9
      $region28: #{conv_block_forward.3} parent=23 // pred_fallthru
        _
    $region24: #{conv_block_forward.3} parent=5 // pred_fallthru
      _
    %p137 = scmp.le.s32.totalorder 1, %s9
    %p138 = scmp.lt.s32.totalorder %s9, 5
    %p139 = pnand %p137, %p138
    %p140 = pneg %p139
    // Predicated region
    $region29: #{conv_block_forward.3} parent=5 // pred_check
      _
    $region30: #{conv_block_forward.3} parent=5 // pred_check_branch
      %142 = sbr.rel (%p139) target = $region32
    $region31: #{conv_block_forward.3} parent=5 // pred_region
      %s143 = ssub.s32 %s9, 1
      %s144 = smul.u32 16, %s14
      %p145 = scmp.lt.s32.totalorder %s144, 63
      %s146 = scalar_select %p145, %s144, 63
      %s147 = smul.addr %s146, 4
      %s148 = scalar_lea.vmem %s0, %s147
      %p149 = pneg %p35
      %p150 = pneg %p32
      %p151 = pneg %p56
      %p152 = pneg %p53
      %p153 = pneg %p77
      %p154 = pneg %p74
      %p155 = pneg %p103
      %p156 = pneg %p100
      %s157 = smul.u32 16, %s14
      %p158 = scmp.lt.s32.totalorder %s157, 63
      %s159 = scalar_select %p158, %s157, 63
      %s160 = smul.addr %s159, 8
      %s161 = scalar_lea.vmem %s3, %s160
      %s162 = smul.u32 16, %s14
      %p163 = scmp.lt.s32.totalorder %s162, 63
      %s164 = scalar_select %p163, %s162, 63
      %s165 = smul.addr %s164, 4
      %s166 = scalar_lea.vmem %s0, %s165
      %s167 = smul.u32 16, %s14
      %s168 = smul.u32 16, %s14
      %p169 = scmp.lt.s32.totalorder %s168, 63
      %s170 = scalar_select %p169, %s168, 63
      %s171 = smul.addr %s170, 8
      %s172 = scalar_lea.vmem %s3, %s171
      %s173 = smul.u32 16, %s14
      %v175 = vld [vmem:[%s166] sm:$0xf]
      %v176 = vld [vmem:[%s166 + $0x4] sm:$0xf]
      %v177 = vld [vmem:[%s166 + $0x8] sm:$0xf]
      %v178 = vld [vmem:[%s166 + $0xc] sm:$0xf]
      %v179 = vld [vmem:[%s166 + $0x10] sm:$0xf]
      %v180 = vld [vmem:[%s166 + $0x14] sm:$0xf]
      %v181 = vld [vmem:[%s166 + $0x18] sm:$0xf]
      %v182 = vld [vmem:[%s166 + $0x1c] sm:$0xf]
      %v183 = vld [vmem:[%s166 + $0x20] sm:$0xf]
      %v184 = vld [vmem:[%s166 + $0x24] sm:$0xf]
      %v185 = vld [vmem:[%s166 + $0x28] sm:$0xf]
      %v186 = vld [vmem:[%s166 + $0x2c] sm:$0xf]
      %v187 = vld [vmem:[%s166 + $0x30] sm:$0xf]
      %v188 = vld [vmem:[%s166 + $0x34] sm:$0xf]
      %v189 = vld [vmem:[%s166 + $0x38] sm:$0xf]
      %v190 = vld [vmem:[%s166 + $0x3c] sm:$0xf]
      %v191 = vld [vmem:[%s1] sm:$0xf]
      %v192 = vld [vmem:[%s1 + $0x4] sm:$0xf]
      %v193 = vld [vmem:[%s1 + $0x8] sm:$0xf]
      %v194 = vld [vmem:[%s1 + $0xc] sm:$0xf]
      %v195 = vld [vmem:[%s1 + $0x10] sm:$0x3]
      %v212 = vunpack.c.l.b16 %v175
      %v213 = vunpack.c.l.b16 %v176
      %v214 = vunpack.c.l.b16 %v177
      %v215 = vunpack.c.l.b16 %v178
      %v216 = vunpack.c.l.b16 %v179
      %v217 = vunpack.c.l.b16 %v180
      %v218 = vunpack.c.l.b16 %v181
      %v219 = vunpack.c.l.b16 %v182
      %v220 = vunpack.c.l.b16 %v183
      %v221 = vunpack.c.l.b16 %v184
      %v222 = vunpack.c.l.b16 %v185
      %v223 = vunpack.c.l.b16 %v186
      %v224 = vunpack.c.l.b16 %v187
      %v225 = vunpack.c.l.b16 %v188
      %v226 = vunpack.c.l.b16 %v189
      %v227 = vunpack.c.l.b16 %v190
      %v228 = vpack.c.b16 %v213, %v212
      %v229 = vpack.c.b16 %v215, %v214
      %v230 = vpack.c.b16 %v217, %v216
      %v231 = vpack.c.b16 %v219, %v218
      %v232 = vpack.c.b16 %v221, %v220
      %v233 = vpack.c.b16 %v223, %v222
      %v234 = vpack.c.b16 %v225, %v224
      %v235 = vpack.c.b16 %v227, %v226
      %v241 = vunpack.c.l.b16 %v191
      %v242 = vunpack.c.l.b16 %v192
      %v243 = vunpack.c.l.b16 %v193
      %v244 = vunpack.c.l.b16 %v194
      %v245 = vunpack.c.l.b16 %v195
      %v246 = vpack.c.b16 %v242, %v241
      %v247 = vpack.c.b16 %v244, %v243
      %v248 = vpack.c.b16 %v245, %v245
      %vm251 = vcmask 293888
      %v253 = vsel %vm251, %v228, 0
      %v256 = vsel %vm251, %v229, 0
      %v259 = vsel %vm251, %v230, 0
      %v262 = vsel %vm251, %v231, 0
      %v265 = vsel %vm251, %v232, 0
      %v268 = vsel %vm251, %v233, 0
      %v271 = vsel %vm251, %v234, 0
      %v274 = vsel %vm251, %v235, 0
      %vm276 = vcmask 1041408
      %v278 = vsel %vm276, %v248, 0
      %280 = vmatprep.subr.bf16.mxu0 0
      %281 = vmatpush1.bf16.msra.mxu0 %v246
      %282 = vmatprep.subr.bf16.mxu0 0
      %283 = vmatpush1.bf16.msra.mxu0 %v247
      %284 = vmatprep.subr.bf16.mxu0 0
      %285 = vmatpush1.bf16.msra.mxu0 %v278
      %286 = vmatprep.subr.bf16.mxu0 0
      %287 = vmatpush1.bf16.msra.mxu0 0
      %288 = vmatprep.subr.bf16.mxu0 0
      %289 = vmatpush1.bf16.msra.mxu0 0
      %290 = vmatprep.subr.bf16.mxu0 0
      %291 = vmatpush1.bf16.msra.mxu0 0
      %292 = vmatprep.subr.bf16.mxu0 0
      %293 = vmatpush1.bf16.msra.mxu0 0
      %294 = vmatprep.subr.bf16.mxu0 0
      %295 = vmatpush1.bf16.msra.mxu0 0
      %296 = vmatprep.subr.bf16.mxu0 0
      %297 = vmatpush1.bf16.msra.mxu0 0
      %298 = vmatprep.subr.bf16.mxu0 0
      %299 = vmatpush1.bf16.msra.mxu0 0
      %300 = vmatprep.subr.bf16.mxu0 0
      %301 = vmatpush1.bf16.msra.mxu0 0
      %302 = vmatprep.subr.bf16.mxu0 0
      %303 = vmatpush1.bf16.msra.mxu0 0
      %304 = vmatprep.subr.bf16.mxu0 0
      %305 = vmatpush1.bf16.msra.mxu0 0
      %306 = vmatprep.subr.bf16.mxu0 0
      %307 = vmatpush1.bf16.msra.mxu0 0
      %308 = vmatprep.subr.bf16.mxu0 0
      %309 = vmatpush1.bf16.msra.mxu0 0
      %310 = vmatprep.subr.bf16.mxu0 0
      %311 = vmatpush1.bf16.msra.mxu0 0
      %312 = vmatprep.mubr.bf16.mxu0 0
      %313 = vmatmul.mubr.bf16.gmra.mrb[0].mxu0 %v253
      %v314 = vpop.f32.mrb[0].mxu0
      %v315 = vadd.f32 0.0, %v314
      %v316 = vpop.f32.mrb[0].mxu0
      %v317 = vpop.f32.mrb[0].mxu0
      %v318 = vadd.f32 0.0, %v317
      %v319 = vpop.f32.mrb[0].mxu0
      %320 = vmatprep.mubr.bf16.mxu0 0
      %321 = vmatmul.mubr.bf16.gmra.mrb[0].mxu0 %v256
      %v322 = vpop.f32.mrb[0].mxu0
      %v323 = vadd.f32 0.0, %v322
      %v324 = vpop.f32.mrb[0].mxu0
      %v325 = vpop.f32.mrb[0].mxu0
      %v326 = vadd.f32 0.0, %v325
      %v327 = vpop.f32.mrb[0].mxu0
      %328 = vmatprep.mubr.bf16.mxu0 0
      %329 = vmatmul.mubr.bf16.gmra.mrb[0].mxu0 %v259
      %v330 = vpop.f32.mrb[0].mxu0
      %v331 = vadd.f32 0.0, %v330
      %v332 = vpop.f32.mrb[0].mxu0
      %v333 = vpop.f32.mrb[0].mxu0
      %v334 = vadd.f32 0.0, %v333
      %v335 = vpop.f32.mrb[0].mxu0
      %336 = vmatprep.mubr.bf16.mxu0 0
      %337 = vmatmul.mubr.bf16.gmra.mrb[0].mxu0 %v262
      %v338 = vpop.f32.mrb[0].mxu0
      %v339 = vadd.f32 0.0, %v338
      %v340 = vpop.f32.mrb[0].mxu0
      %v341 = vpop.f32.mrb[0].mxu0
      %v342 = vadd.f32 0.0, %v341
      %v343 = vpop.f32.mrb[0].mxu0
      %344 = vmatprep.mubr.bf16.mxu0 0
      %345 = vmatmul.mubr.bf16.gmra.mrb[0].mxu0 %v265
      %v346 = vpop.f32.mrb[0].mxu0
      %v347 = vadd.f32 0.0, %v346
      %v348 = vpop.f32.mrb[0].mxu0
      %v349 = vpop.f32.mrb[0].mxu0
      %v350 = vadd.f32 0.0, %v349
      %v351 = vpop.f32.mrb[0].mxu0
      %352 = vmatprep.mubr.bf16.mxu0 0
      %353 = vmatmul.mubr.bf16.gmra.mrb[0].mxu0 %v268
      %v354 = vpop.f32.mrb[0].mxu0
      %v355 = vadd.f32 0.0, %v354
      %v356 = vpop.f32.mrb[0].mxu0
      %v357 = vpop.f32.mrb[0].mxu0
      %v358 = vadd.f32 0.0, %v357
      %v359 = vpop.f32.mrb[0].mxu0
      %360 = vmatprep.mubr.bf16.mxu0 0
      %361 = vmatmul.mubr.bf16.gmra.mrb[0].mxu0 %v271
      %v362 = vpop.f32.mrb[0].mxu0
      %v363 = vadd.f32 0.0, %v362
      %v364 = vpop.f32.mrb[0].mxu0
      %v365 = vpop.f32.mrb[0].mxu0
      %v366 = vadd.f32 0.0, %v365
      %v367 = vpop.f32.mrb[0].mxu0
      %368 = vmatprep.mubr.bf16.mxu0 0
      %369 = vmatmul.mubr.bf16.gmra.mrb[0].mxu0 %v274
      %v370 = vpop.f32.mrb[0].mxu0
      %v371 = vadd.f32 0.0, %v370
      %v372 = vpop.f32.mrb[0].mxu0
      %v373 = vpop.f32.mrb[0].mxu0
      %v374 = vadd.f32 0.0, %v373
      %v375 = vpop.f32.mrb[0].mxu0
      %376 = vdwg.mxu0
      %v377 = vld [vmem:[%s2] sm:$0x1]
      %v378 = vld [vmem:[%s2 + $0x1] sm:$0x1]
      %v379 = vld [vmem:[%s2 + $0x2] sm:$0x1]
      %v380 = vlaneseq
      %v381 = vshrl.u32 %v380, 7
      %v382 = vsub.s32 0, %v381
      %v383 = vrot.slane %v377, %v382
      %v384 = vmul.f32 %v315, %v383
      %v385 = vmul.f32 %v318, %v383
      %v386 = vmul.f32 %v323, %v383
      %v387 = vmul.f32 %v326, %v383
      %v388 = vmul.f32 %v331, %v383
      %v389 = vmul.f32 %v334, %v383
      %v390 = vmul.f32 %v339, %v383
      %v391 = vmul.f32 %v342, %v383
      %v392 = vmul.f32 %v347, %v383
      %v393 = vmul.f32 %v350, %v383
      %v394 = vmul.f32 %v355, %v383
      %v395 = vmul.f32 %v358, %v383
      %v396 = vmul.f32 %v363, %v383
      %v397 = vmul.f32 %v366, %v383
      %v398 = vmul.f32 %v371, %v383
      %v399 = vmul.f32 %v374, %v383
      %v400 = vlaneseq
      %v401 = vshrl.u32 %v400, 7
      %v402 = vsub.s32 0, %v401
      %v403 = vrot.slane %v378, %v402
      %v404 = vadd.f32 %v384, %v403
      %v405 = vadd.f32 %v385, %v403
      %v406 = vadd.f32 %v386, %v403
      %v407 = vadd.f32 %v387, %v403
      %v408 = vadd.f32 %v388, %v403
      %v409 = vadd.f32 %v389, %v403
      %v410 = vadd.f32 %v390, %v403
      %v411 = vadd.f32 %v391, %v403
      %v412 = vadd.f32 %v392, %v403
      %v413 = vadd.f32 %v393, %v403
      %v414 = vadd.f32 %v394, %v403
      %v415 = vadd.f32 %v395, %v403
      %v416 = vadd.f32 %v396, %v403
      %v417 = vadd.f32 %v397, %v403
      %v418 = vadd.f32 %v398, %v403
      %v419 = vadd.f32 %v399, %v403
      %vm420 = vcmp.ge.f32.partialorder %v404, 0.0
      %vm421 = vcmp.ge.f32.partialorder %v405, 0.0
      %vm422 = vcmp.ge.f32.partialorder %v406, 0.0
      %vm423 = vcmp.ge.f32.partialorder %v407, 0.0
      %vm424 = vcmp.ge.f32.partialorder %v408, 0.0
      %vm425 = vcmp.ge.f32.partialorder %v409, 0.0
      %vm426 = vcmp.ge.f32.partialorder %v410, 0.0
      %vm427 = vcmp.ge.f32.partialorder %v411, 0.0
      %vm428 = vcmp.ge.f32.partialorder %v412, 0.0
      %vm429 = vcmp.ge.f32.partialorder %v413, 0.0
      %vm430 = vcmp.ge.f32.partialorder %v414, 0.0
      %vm431 = vcmp.ge.f32.partialorder %v415, 0.0
      %vm432 = vcmp.ge.f32.partialorder %v416, 0.0
      %vm433 = vcmp.ge.f32.partialorder %v417, 0.0
      %vm434 = vcmp.ge.f32.partialorder %v418, 0.0
      %vm435 = vcmp.ge.f32.partialorder %v419, 0.0
      %v436 = vlaneseq
      %v437 = vshrl.u32 %v436, 7
      %v438 = vsub.s32 0, %v437
      %v439 = vrot.slane %v379, %v438
      %v440 = vmul.f32 %v439, %v404
      %v441 = vmul.f32 %v439, %v405
      %v442 = vmul.f32 %v439, %v406
      %v443 = vmul.f32 %v439, %v407
      %v444 = vmul.f32 %v439, %v408
      %v445 = vmul.f32 %v439, %v409
      %v446 = vmul.f32 %v439, %v410
      %v447 = vmul.f32 %v439, %v411
      %v448 = vmul.f32 %v439, %v412
      %v449 = vmul.f32 %v439, %v413
      %v450 = vmul.f32 %v439, %v414
      %v451 = vmul.f32 %v439, %v415
      %v452 = vmul.f32 %v439, %v416
      %v453 = vmul.f32 %v439, %v417
      %v454 = vmul.f32 %v439, %v418
      %v455 = vmul.f32 %v439, %v419
      %v456 = vsel %vm420, %v404, %v440
      %v457 = vsel %vm421, %v405, %v441
      %v458 = vsel %vm422, %v406, %v442
      %v459 = vsel %vm423, %v407, %v443
      %v460 = vsel %vm424, %v408, %v444
      %v461 = vsel %vm425, %v409, %v445
      %v462 = vsel %vm426, %v410, %v446
      %v463 = vsel %vm427, %v411, %v447
      %v464 = vsel %vm428, %v412, %v448
      %v465 = vsel %vm429, %v413, %v449
      %v466 = vsel %vm430, %v414, %v450
      %v467 = vsel %vm431, %v415, %v451
      %v468 = vsel %vm432, %v416, %v452
      %v469 = vsel %vm433, %v417, %v453
      %v470 = vsel %vm434, %v418, %v454
      %v471 = vsel %vm435, %v419, %v455
      %vm472 = vcmask 64512
      %473 = vst.msk [vmem:[%s172] sm:$0xff] %vm472, %v456
      %474 = vst.msk [vmem:[%s172 + $0x8] sm:$0xff] %vm472, %v457
      %475 = vst.msk [vmem:[%s172 + $0x10] sm:$0xff] %vm472, %v458
      %476 = vst.msk [vmem:[%s172 + $0x18] sm:$0xff] %vm472, %v459
      %477 = vst.msk [vmem:[%s172 + $0x20] sm:$0xff] %vm472, %v460
      %478 = vst.msk [vmem:[%s172 + $0x28] sm:$0xff] %vm472, %v461
      %479 = vst.msk [vmem:[%s172 + $0x30] sm:$0xff] %vm472, %v462
      %480 = vst.msk [vmem:[%s172 + $0x38] sm:$0xff] %vm472, %v463
      %481 = vst.msk [vmem:[%s172 + $0x40] sm:$0xff] %vm472, %v464
      %482 = vst.msk [vmem:[%s172 + $0x48] sm:$0xff] %vm472, %v465
      %483 = vst.msk [vmem:[%s172 + $0x50] sm:$0xff] %vm472, %v466
      %484 = vst.msk [vmem:[%s172 + $0x58] sm:$0xff] %vm472, %v467
      %485 = vst.msk [vmem:[%s172 + $0x60] sm:$0xff] %vm472, %v468
      %486 = vst.msk [vmem:[%s172 + $0x68] sm:$0xff] %vm472, %v469
      %487 = vst.msk [vmem:[%s172 + $0x70] sm:$0xff] %vm472, %v470
      %488 = vst.msk [vmem:[%s172 + $0x78] sm:$0xff] %vm472, %v471
      %s489 = smul.u32 16, %s14
      %p490 = scmp.lt.s32.totalorder %s489, 63
      %s491 = scalar_select %p490, %s489, 63
      %s492 = smul.addr %s491, 8
      %s493 = scalar_lea.vmem %s3, %s492
      // Predicated region
      $region33: #{conv_block_forward.3} parent=31 // pred_check
        %p494 = pneg %p100
      $region34: #{conv_block_forward.3} parent=31 // pred_check_branch
        %496 = sbr.rel (%p494) target = $region36
      $region35: #{conv_block_forward.3} parent=31 // pred_region
        %s497 = smul.u32 16, %s14
      $region36: #{conv_block_forward.3} parent=31 // pred_fallthru
        _
    $region32: #{conv_block_forward.3} parent=5 // pred_fallthru
      _
    %p498 = scmp.le.s32.totalorder 2, %s9
    // Predicated region
    $region37: #{conv_block_forward.3} parent=5 // pred_check
      %p499 = pneg %p498
    $region38: #{conv_block_forward.3} parent=5 // pred_check_branch
      %501 = sbr.rel (%p499) target = $region40
    $region39: #{conv_block_forward.3} parent=5 // pred_region
      %s502 = ssub.s32 %s9, 2
      // Predicated region
      $region41: #{conv_block_forward.3} parent=39 // pred_check
        %p503 = pneg %p106
      $region42: #{conv_block_forward.3} parent=39 // pred_check_branch
        %505 = sbr.rel (%p503) target = $region44
      $region43: #{conv_block_forward.3} parent=39 // pred_region
        %s506 = smul.u32 16, %s15
        %p507 = scmp.lt.s32.totalorder %s506, 63
        %s508 = scalar_select %p507, %s506, 63
        %s509 = smul.addr %s508, 8
        %s510 = scalar_lea.vmem %s3, %s509
      $region44: #{conv_block_forward.3} parent=39 // pred_fallthru
        _
    $region40: #{conv_block_forward.3} parent=5 // pred_fallthru
      _
  $region6: #{conv_block_forward.3} parent=0 // loop_footer
    %s13 = sadd.s32 1, %s9
  $region7: #{conv_block_forward.3} parent=0 // loop_footer_branch
    %8 = sbr.rel target = $region3
  $region8: #{conv_block_forward.3} parent=0 // loop_exit
    _

</llo_original>
